<compile_context>
chip_gen: v7x
topology: tpu7x:2x2x1
jax: 0.10.0
libtpu: 0.0.40
codegen_flags: <defaults>
</compile_context>

<pallas_src>
import jax
import jax.numpy as jnp
from jax.experimental import pallas as pl
from jax.experimental.pallas import tpu as pltpu


def _round_up(n, m):
    return ((n + m - 1) // m) * m


def policy_resample_kernel(xt_ref, w1t_ref, b1_ref, wd_ref, bd_ref, o_ref):
    # xt_ref : (D_in, TB)   input tile, batch on the lane axis (lane-dense)
    # w1t_ref: (H, D_in)    affine1 weight (torch (out,in) layout), resident
    # b1_ref : (H, 1)       affine1 bias (column), resident
    # wd_ref : (1, H)       w2[:,0] - w2[:,1]  (logit-difference row), resident
    # bd_ref : (1, 1)       b2[0] - b2[1], resident
    # o_ref  : (2, TB)      row 0 = p(class 0), row 1 = p(class 1)
    ht = jnp.dot(w1t_ref[...], xt_ref[...],
                 preferred_element_type=jnp.float32)          # (H, TB)  MXU
    ht = jnp.maximum(ht + b1_ref[...], 0.0)                   # relu(affine1)
    # 2-class softmax == sigmoid of the logit difference (exact).
    d = jnp.dot(wd_ref[...], ht, preferred_element_type=jnp.float32)
    d = d + bd_ref[...]                                       # (1, TB)
    p0 = 1.0 / (1.0 + jnp.exp(-d))                            # exp -> EUP slot
    o_ref[0:1, :] = p0
    o_ref[1:2, :] = 1.0 - p0


def policy_resample_forward(x, w1, b1, w2, b2, *, block_b=2048):
    """x: (B, D_in) f32; w1: (D_in, 64); b1: (64,); w2: (64, 2); b2: (2,).

    Returns softmax(relu(x @ w1 + b1) @ w2 + b2, axis=1), shape (B, 2)."""
    B, d_in = x.shape
    H = w1.shape[1]

    # Lane-dense tiling: batch maps to the 128-lane axis; pad to a tile multiple
    # so every grid step sees a full, unmasked tile.
    tb = min(block_b, _round_up(max(B, 1), 128))
    b_pad = _round_up(B, tb)

    xt = jnp.zeros((d_in, b_pad), jnp.float32).at[:, :B].set(x.T)
    w1t = w1.T.astype(jnp.float32)                       # (H, D_in)
    b1c = b1.reshape(H, 1).astype(jnp.float32)           # (H, 1)
    wd = (w2[:, 0] - w2[:, 1]).reshape(1, H).astype(jnp.float32)
    bd = (b2[0] - b2[1]).reshape(1, 1).astype(jnp.float32)

    grid = (b_pad // tb,)
    cost = pl.CostEstimate(
        flops=2 * b_pad * d_in * H + 2 * b_pad * H,
        transcendentals=b_pad,
        bytes_accessed=4 * (d_in * b_pad + H * d_in + 2 * H + 1 + 2 * b_pad),
    )

    out_t = pl.pallas_call(
        policy_resample_kernel,
        out_shape=jax.ShapeDtypeStruct((2, b_pad), jnp.float32),
        grid=grid,
        in_specs=[
            pl.BlockSpec((d_in, tb), lambda i: (0, i)),   # x^T tile (pipelined)
            pl.BlockSpec((H, d_in), lambda i: (0, 0)),    # resident weights
            pl.BlockSpec((H, 1), lambda i: (0, 0)),
            pl.BlockSpec((1, H), lambda i: (0, 0)),
            pl.BlockSpec((1, 1), lambda i: (0, 0)),
        ],
        out_specs=pl.BlockSpec((2, tb), lambda i: (0, i)),
        compiler_params=pltpu.CompilerParams(
            dimension_semantics=("parallel",)),
        cost_estimate=cost,
    )(xt, w1t, b1c, wd, bd)

    return out_t[:, :B].T                                # (B, 2)


def init_params(key, in_dim, hidden=64, out_dim=2):
    """Deterministic init mimicking nn.Linear's uniform(-1/sqrt(fan_in), ...)."""
    k1, k2, k3, k4 = jax.random.split(key, 4)
    lim1 = 1.0 / jnp.sqrt(jnp.float32(in_dim))
    lim2 = 1.0 / jnp.sqrt(jnp.float32(hidden))
    # Stored as (in, out) — i.e. transposed relative to torch's (out, in).
    w1 = jax.random.uniform(k1, (in_dim, hidden), jnp.float32, -lim1, lim1)
    b1 = jax.random.uniform(k2, (hidden,), jnp.float32, -lim1, lim1)
    w2 = jax.random.uniform(k3, (hidden, out_dim), jnp.float32, -lim2, lim2)
    b2 = jax.random.uniform(k4, (out_dim,), jnp.float32, -lim2, lim2)
    return w1, b1, w2, b2


if __name__ == "__main__":
    # Small, forward-consistent shapes: state_dim=12, latent_dim=8, prob_dim=4
    # -> in_dim = state_dim + 2*latent_dim + prob_dim = 32, batch = 8.
    # TODO(synk): select_action / update (Categorical sampling + Adam step)
    # are host-side RL bookkeeping, not part of the forward pass.
    state_dim, latent_dim, prob_dim = 12, 8, 4
    in_dim = state_dim + 2 * latent_dim + prob_dim
    batch = 8

    key = jax.random.PRNGKey(0)
    kx, kp = jax.random.split(key)
    x = jax.random.normal(kx, (batch, in_dim), jnp.float32)
    w1, b1, w2, b2 = init_params(kp, in_dim)

    probs = policy_resample_forward(x, w1, b1, w2, b2)
    probs = jax.block_until_ready(probs)

    # Reference check in plain JAX.
    h_ref = jnp.maximum(x @ w1 + b1, 0.0)
    s_ref = h_ref @ w2 + b2
    ref = jax.nn.softmax(s_ref, axis=1)
    assert probs.shape == (batch, 2)
    assert jnp.allclose(probs, ref, atol=1e-5), "mismatch vs reference"
    assert jnp.allclose(jnp.sum(probs, axis=1), 1.0, atol=1e-5)

    print("KERNEL_OK")
</pallas_src>

<mosaic_0001>
module attributes {stable_mosaic.version = 11 : i64} {
  func.func @policy_resample_kernel(%arg0: i32, %arg1: memref<32x128xf32, #tpu.memory_space<vmem>>, %arg2: memref<64x32xf32, #tpu.memory_space<vmem>>, %arg3: memref<64x1xf32, #tpu.memory_space<vmem>>, %arg4: memref<1x64xf32, #tpu.memory_space<vmem>>, %arg5: memref<1x1xf32, #tpu.memory_space<vmem>>, %arg6: memref<2x128xf32, #tpu.memory_space<vmem>>) attributes {dimension_semantics = [#tpu.dimension_semantics<parallel>], iteration_bounds = array<i64: 1>, scalar_prefetch = 0 : i64, scratch_operands = 0 : i64, tpu.core_type = #tpu.core_type<tc>, window_params = [{transform_indices = @transform_0, window_bounds = array<i64: 32, 128>}, {pipeline_mode = #tpu.pipeline_mode<synchronous>, transform_indices = @transform_1, window_bounds = array<i64: 64, 32>}, {pipeline_mode = #tpu.pipeline_mode<synchronous>, transform_indices = @transform_2, window_bounds = array<i64: 64, 1>}, {pipeline_mode = #tpu.pipeline_mode<synchronous>, transform_indices = @transform_3, window_bounds = array<i64: 1, 64>}, {pipeline_mode = #tpu.pipeline_mode<synchronous>, transform_indices = @transform_4, window_bounds = array<i64: 1, 1>}, {transform_indices = @transform_5, window_bounds = array<i64: 2, 128>}]} {
    %c0 = arith.constant 0 : index
    %c0_0 = arith.constant 0 : index
    %0 = vector.load %arg2[%c0, %c0_0] : memref<64x32xf32, #tpu.memory_space<vmem>>, vector<64x32xf32>
    %c0_1 = arith.constant 0 : index
    %c0_2 = arith.constant 0 : index
    %1 = vector.load %arg1[%c0_1, %c0_2] : memref<32x128xf32, #tpu.memory_space<vmem>>, vector<32x128xf32>
    %cst = arith.constant dense<0.000000e+00> : vector<64x128xf32>
    %2 = tpu.matmul %0, %1, %cst {dimension_numbers = #tpu.dot_dimension_numbers<[1], [0], [0], [1], [0, 0, 1, 1], [], []>} : vector<64x32xf32>, vector<32x128xf32>, vector<64x128xf32> -> vector<64x128xf32>
    %c0_3 = arith.constant 0 : index
    %c0_4 = arith.constant 0 : index
    %3 = vector.load %arg3[%c0_3, %c0_4] : memref<64x1xf32, #tpu.memory_space<vmem>>, vector<64x1xf32>
    %4 = vector.broadcast %3 : vector<64x1xf32> to vector<64x128xf32>
    %5 = arith.addf %2, %4 : vector<64x128xf32>
    %cst_5 = arith.constant 0.000000e+00 : f32
    %6 = vector.broadcast %cst_5 : f32 to vector<64x128xf32>
    %7 = arith.maximumf %5, %6 : vector<64x128xf32>
    %c0_6 = arith.constant 0 : index
    %c0_7 = arith.constant 0 : index
    %8 = vector.load %arg4[%c0_6, %c0_7] : memref<1x64xf32, #tpu.memory_space<vmem>>, vector<1x64xf32>
    %cst_8 = arith.constant dense<0.000000e+00> : vector<1x128xf32>
    %9 = tpu.matmul %8, %7, %cst_8 {dimension_numbers = #tpu.dot_dimension_numbers<[1], [0], [0], [1], [0, 0, 1, 1], [], []>} : vector<1x64xf32>, vector<64x128xf32>, vector<1x128xf32> -> vector<1x128xf32>
    %c0_9 = arith.constant 0 : index
    %c0_10 = arith.constant 0 : index
    %10 = vector.load %arg5[%c0_9, %c0_10] : memref<1x1xf32, #tpu.memory_space<vmem>>, vector<1x1xf32>
    %11 = vector.broadcast %10 : vector<1x1xf32> to vector<1x128xf32>
    %12 = arith.addf %9, %11 : vector<1x128xf32>
    %cst_11 = arith.constant 0.000000e+00 : f32
    %13 = vector.broadcast %cst_11 : f32 to vector<1x128xf32>
    %14 = arith.subf %13, %12 : vector<1x128xf32>
    %15 = math.exp %14 : vector<1x128xf32>
    %cst_12 = arith.constant 1.000000e+00 : f32
    %16 = vector.broadcast %cst_12 : f32 to vector<1x128xf32>
    %17 = arith.addf %16, %15 : vector<1x128xf32>
    %cst_13 = arith.constant 1.000000e+00 : f32
    %18 = vector.broadcast %cst_13 : f32 to vector<1x128xf32>
    %19 = arith.divf %18, %17 : vector<1x128xf32>
    %c0_14 = arith.constant 0 : index
    %c0_15 = arith.constant 0 : index
    %20 = vector.load %arg6[%c0_14, %c0_15] : memref<2x128xf32, #tpu.memory_space<vmem>>, vector<1x128xf32>
    tpu.vector_store %arg6[%c0_14, %c0_15], %19 {strides = array<i32>} : memref<2x128xf32, #tpu.memory_space<vmem>>, vector<1x128xf32>,
    %cst_16 = arith.constant 1.000000e+00 : f32
    %21 = vector.broadcast %cst_16 : f32 to vector<1x128xf32>
    %22 = arith.subf %21, %19 : vector<1x128xf32>
    %c1 = arith.constant 1 : index
    %c0_17 = arith.constant 0 : index
    %23 = vector.load %arg6[%c1, %c0_17] : memref<2x128xf32, #tpu.memory_space<vmem>>, vector<1x128xf32>
    tpu.vector_store %arg6[%c1, %c0_17], %22 {strides = array<i32>} : memref<2x128xf32, #tpu.memory_space<vmem>>, vector<1x128xf32>,
    return
  }
  func.func @transform_0(%arg0: i32) -> (i32, i32) {
    %c0_i32 = arith.constant 0 : i32
    %c0_i32_0 = arith.constant 0 : i32
    return %c0_i32, %arg0 : i32, i32
  }
  func.func @transform_1(%arg0: i32) -> (i32, i32) {
    %c0_i32 = arith.constant 0 : i32
    %c0_i32_0 = arith.constant 0 : i32
    %c0_i32_1 = arith.constant 0 : i32
    return %c0_i32, %c0_i32_0 : i32, i32
  }
  func.func @transform_2(%arg0: i32) -> (i32, i32) {
    %c0_i32 = arith.constant 0 : i32
    %c0_i32_0 = arith.constant 0 : i32
    %c0_i32_1 = arith.constant 0 : i32
    return %c0_i32, %c0_i32_0 : i32, i32
  }
  func.func @transform_3(%arg0: i32) -> (i32, i32) {
    %c0_i32 = arith.constant 0 : i32
    %c0_i32_0 = arith.constant 0 : i32
    %c0_i32_1 = arith.constant 0 : i32
    return %c0_i32, %c0_i32_0 : i32, i32
  }
  func.func @transform_4(%arg0: i32) -> (i32, i32) {
    %c0_i32 = arith.constant 0 : i32
    %c0_i32_0 = arith.constant 0 : i32
    %c0_i32_1 = arith.constant 0 : i32
    return %c0_i32, %c0_i32_0 : i32, i32
  }
  func.func @transform_5(%arg0: i32) -> (i32, i32) {
    %c0_i32 = arith.constant 0 : i32
    %c0_i32_0 = arith.constant 0 : i32
    return %c0_i32, %arg0 : i32, i32
  }
}

</mosaic_0001>

<llo_original>
// kernel: tpu_custom_call.1
$region0: #{tpu_custom_call.1}
  #allocation0 [shape = 'u32[]', space=smem, size = 0x4, offset = 0x4, fixed_abs, tag = 'smem constant byte address 0x4 - core index']
  #allocation1 [shape = 'u32[144,128]{1,0:T(1,128)}', space=vmem, size = 0x12000, scoped, tag = 'internal scratch']
  #allocation2 [shape = 'f32[1,1]{1,0:T(1,128)S(1)}', space=vmem, size = 0x200, scoped, tag = 'scoped memory for tpu_custom_call.1']
  %s0 = inlined_call_operand.vmem [shape: f32[32,128], index: 0, kind: input, shape index: {}]
  %s1 = inlined_call_operand.vmem [shape: f32[64,32], index: 1, kind: input, shape index: {}]
  %s2 = inlined_call_operand.vmem [shape: f32[64,1], index: 2, kind: input, shape index: {}]
  %s3 = inlined_call_operand.vmem [shape: f32[1,64], index: 3, kind: input, shape index: {}]
  %s4 = inlined_call_operand.<no memory space> [shape: f32[1,1], index: 4, kind: input, shape index: {}]
  %s5 = inlined_call_operand.hbm [shape: f32[2,128], index: 5, kind: output, shape index: {}]
  %s6 = sld [smem:[#allocation0]]
  $region30: #{tpu_custom_call.1} parent=0
    _
  %s8 = ssub.s32 1, %s6
  %s9 = scalar_select 0, %s8, %s6
  %v10 = vstv %s4
  %11 = vst [vmem:[#allocation2] sm:$0x1] %v10
  $region1: #{tpu_custom_call.1} parent=0
    #allocation3 [shape = 'u8[1024]{0}', space=vmem, size = 0x400, scoped, tag = 'output window, operand 0, single buffered']
    #allocation4 [shape = 's32[1]{0}', space=sflag, size = 0x4, scoped, tag = 'scoped memory for tpu_custom_call.1']
    %12 = vsyncpa [#allocation4], 0
    // Predicated region
    $region2: #{tpu_custom_call.1} parent=1 // pred_check
      _
    $region3: #{tpu_custom_call.1} parent=1 // pred_check_branch
      %14 = sbr.rel (0) target = $region5
    $region4: #{tpu_custom_call.1} parent=1 // pred_region
      _
    $region5: #{tpu_custom_call.1} parent=1 // pred_fallthru
      _
    // Predicated region
    $region6: #{tpu_custom_call.1} parent=1 // pred_check
      _
    $region7: #{tpu_custom_call.1} parent=1 // pred_check_branch
      %16 = sbr.rel (0) target = $region9
    $region8: #{tpu_custom_call.1} parent=1 // pred_region
      _
    $region9: #{tpu_custom_call.1} parent=1 // pred_fallthru
      _
    // Predicated region
    $region10: #{tpu_custom_call.1} parent=1 // pred_check
      _
    $region11: #{tpu_custom_call.1} parent=1 // pred_check_branch
      %18 = sbr.rel (0) target = $region13
    $region12: #{tpu_custom_call.1} parent=1 // pred_region
      _
    $region13: #{tpu_custom_call.1} parent=1 // pred_fallthru
      _
    // Predicated region
    $region14: #{tpu_custom_call.1} parent=1 // pred_check
      _
    $region15: #{tpu_custom_call.1} parent=1 // pred_check_branch
      %20 = sbr.rel (0) target = $region17
    $region16: #{tpu_custom_call.1} parent=1 // pred_region
      _
    $region17: #{tpu_custom_call.1} parent=1 // pred_fallthru
      _
    // Predicated region
    $region18: #{tpu_custom_call.1} parent=1 // pred_check
      _
    $region19: #{tpu_custom_call.1} parent=1 // pred_check_branch
      %22 = sbr.rel (0) target = $region21
    $region20: #{tpu_custom_call.1} parent=1 // pred_region
      _
    $region21: #{tpu_custom_call.1} parent=1 // pred_fallthru
      _
    %v23 = vld [vmem:[%s1] sm:$0xff]
    %v24 = vld [vmem:[%s1 + $0x8] sm:$0xff]
    %v25 = vld [vmem:[%s1 + $0x10] sm:$0xff]
    %v26 = vld [vmem:[%s1 + $0x18] sm:$0xff]
    %v27 = vld [vmem:[%s1 + $0x20] sm:$0xff]
    %v28 = vld [vmem:[%s1 + $0x28] sm:$0xff]
    %v29 = vld [vmem:[%s1 + $0x30] sm:$0xff]
    %v30 = vld [vmem:[%s1 + $0x38] sm:$0xff]
    %v31 = vld [vmem:[%s0] sm:$0xff]
    %v32 = vld [vmem:[%s0 + $0x8] sm:$0xff]
    %v33 = vld [vmem:[%s0 + $0x10] sm:$0xff]
    %v34 = vld [vmem:[%s0 + $0x18] sm:$0xff]
    %v35 = vld [vmem:[%s2] sm:$0xff]
    %v36 = vld [vmem:[%s2 + $0x8] sm:$0xff]
    %v37 = vld [vmem:[%s2 + $0x10] sm:$0xff]
    %v38 = vld [vmem:[%s2 + $0x18] sm:$0xff]
    %v39 = vld [vmem:[%s2 + $0x20] sm:$0xff]
    %v40 = vld [vmem:[%s2 + $0x28] sm:$0xff]
    %v41 = vld [vmem:[%s2 + $0x30] sm:$0xff]
    %v42 = vld [vmem:[%s2 + $0x38] sm:$0xff]
    %44 = vset.pattern.permute.xlu0 0
    %45 = vperm.xlu0 %44, %v35
    %v46 = vpop.permute.xlu0 %45
    %49 = vset.pattern.permute.xlu0 0
    %50 = vperm.xlu0 %49, %v36
    %v51 = vpop.permute.xlu0 %50
    %54 = vset.pattern.permute.xlu0 0
    %55 = vperm.xlu0 %54, %v37
    %v56 = vpop.permute.xlu0 %55
    %59 = vset.pattern.permute.xlu0 0
    %60 = vperm.xlu0 %59, %v38
    %v61 = vpop.permute.xlu0 %60
    %64 = vset.pattern.permute.xlu0 0
    %65 = vperm.xlu0 %64, %v39
    %v66 = vpop.permute.xlu0 %65
    %69 = vset.pattern.permute.xlu0 0
    %70 = vperm.xlu0 %69, %v40
    %v71 = vpop.permute.xlu0 %70
    %74 = vset.pattern.permute.xlu0 0
    %75 = vperm.xlu0 %74, %v41
    %v76 = vpop.permute.xlu0 %75
    %79 = vset.pattern.permute.xlu0 0
    %80 = vperm.xlu0 %79, %v42
    %v81 = vpop.permute.xlu0 %80
    %vm83 = vcmask 261120
    %v85 = vsel %vm83, %v23, 0
    %v88 = vsel %vm83, %v24, 0
    %v91 = vsel %vm83, %v25, 0
    %v94 = vsel %vm83, %v26, 0
    %v97 = vsel %vm83, %v27, 0
    %v100 = vsel %vm83, %v28, 0
    %v103 = vsel %vm83, %v29, 0
    %v106 = vsel %vm83, %v30, 0
    %108 = vmatprep.subr.mxu0 0.0
    %109 = vmatpush1.msra.mxu0 %v31
    %110 = vmatprep.subr.mxu0 0.0
    %111 = vmatpush1.msra.mxu0 %v32
    %112 = vmatprep.subr.mxu0 0.0
    %113 = vmatpush1.msra.mxu0 %v33
    %114 = vmatprep.subr.mxu0 0.0
    %115 = vmatpush1.msra.mxu0 %v34
    %116 = vmatprep.subr.mxu0 0.0
    %117 = vmatpush1.msra.mxu0 0.0
    %118 = vmatprep.subr.mxu0 0.0
    %119 = vmatpush1.msra.mxu0 0.0
    %120 = vmatprep.subr.mxu0 0.0
    %121 = vmatpush1.msra.mxu0 0.0
    %122 = vmatprep.subr.mxu0 0.0
    %123 = vmatpush1.msra.mxu0 0.0
    %124 = vmatprep.subr.mxu0 0.0
    %125 = vmatpush1.msra.mxu0 0.0
    %126 = vmatprep.subr.mxu0 0.0
    %127 = vmatpush1.msra.mxu0 0.0
    %128 = vmatprep.subr.mxu0 0.0
    %129 = vmatpush1.msra.mxu0 0.0
    %130 = vmatprep.subr.mxu0 0.0
    %131 = vmatpush1.msra.mxu0 0.0
    %132 = vmatprep.subr.mxu0 0.0
    %133 = vmatpush1.msra.mxu0 0.0
    %134 = vmatprep.subr.mxu0 0.0
    %135 = vmatpush1.msra.mxu0 0.0
    %136 = vmatprep.subr.mxu0 0.0
    %137 = vmatpush1.msra.mxu0 0.0
    %138 = vmatprep.subr.mxu0 0.0
    %139 = vmatpush1.msra.mxu0 0.0
    %140 = vmatprep.subr.mxu0 0.0
    %141 = vmatpush1.msra.mxu0 0.0
    %142 = vmatprep.subr.mxu0 0.0
    %143 = vmatpush1.msra.mxu0 0.0
    %144 = vmatprep.subr.mxu0 0.0
    %145 = vmatpush1.msra.mxu0 0.0
    %146 = vmatprep.subr.mxu0 0.0
    %147 = vmatpush1.msra.mxu0 0.0
    %148 = vmatprep.subr.mxu0 0.0
    %149 = vmatpush1.msra.mxu0 0.0
    %150 = vmatprep.subr.mxu0 0.0
    %151 = vmatpush1.msra.mxu0 0.0
    %152 = vmatprep.subr.mxu0 0.0
    %153 = vmatpush1.msra.mxu0 0.0
    %154 = vmatprep.subr.mxu0 0.0
    %155 = vmatpush1.msra.mxu0 0.0
    %156 = vmatprep.subr.mxu0 0.0
    %157 = vmatpush1.msra.mxu0 0.0
    %158 = vmatprep.subr.mxu0 0.0
    %159 = vmatpush1.msra.mxu0 0.0
    %160 = vmatprep.subr.mxu0 0.0
    %161 = vmatpush1.msra.mxu0 0.0
    %162 = vmatprep.subr.mxu0 0.0
    %163 = vmatpush1.msra.mxu0 0.0
    %164 = vmatprep.subr.mxu0 0.0
    %165 = vmatpush1.msra.mxu0 0.0
    %166 = vmatprep.subr.mxu0 0.0
    %167 = vmatpush1.msra.mxu0 0.0
    %168 = vmatprep.subr.mxu0 0.0
    %169 = vmatpush1.msra.mxu0 0.0
    %170 = vmatprep.subr.mxu0 0.0
    %171 = vmatpush1.msra.mxu0 0.0
    %172 = vmatprep.mubr.f32.mxu0 0.0
    %173 = vmatmul.mubr.f32.gmra.mrb[0].mxu0 %v85
    %v174 = vpop.f32.mrb[0].mxu0
    %v175 = vadd.f32 %v46, %v174
    %v176 = vpop.f32.mrb[0].mxu0
    %177 = vmatprep.mubr.f32.mxu0 0.0
    %178 = vmatmul.mubr.f32.gmra.mrb[0].mxu0 %v88
    %v179 = vpop.f32.mrb[0].mxu0
    %v180 = vadd.f32 %v51, %v179
    %v181 = vpop.f32.mrb[0].mxu0
    %182 = vmatprep.mubr.f32.mxu0 0.0
    %183 = vmatmul.mubr.f32.gmra.mrb[0].mxu0 %v91
    %v184 = vpop.f32.mrb[0].mxu0
    %v185 = vadd.f32 %v56, %v184
    %v186 = vpop.f32.mrb[0].mxu0
    %187 = vmatprep.mubr.f32.mxu0 0.0
    %188 = vmatmul.mubr.f32.gmra.mrb[0].mxu0 %v94
    %v189 = vpop.f32.mrb[0].mxu0
    %v190 = vadd.f32 %v61, %v189
    %v191 = vpop.f32.mrb[0].mxu0
    %192 = vmatprep.mubr.f32.mxu0 0.0
    %193 = vmatmul.mubr.f32.gmra.mrb[0].mxu0 %v97
    %v194 = vpop.f32.mrb[0].mxu0
    %v195 = vadd.f32 %v66, %v194
    %v196 = vpop.f32.mrb[0].mxu0
    %197 = vmatprep.mubr.f32.mxu0 0.0
    %198 = vmatmul.mubr.f32.gmra.mrb[0].mxu0 %v100
    %v199 = vpop.f32.mrb[0].mxu0
    %v200 = vadd.f32 %v71, %v199
    %v201 = vpop.f32.mrb[0].mxu0
    %202 = vmatprep.mubr.f32.mxu0 0.0
    %203 = vmatmul.mubr.f32.gmra.mrb[0].mxu0 %v103
    %v204 = vpop.f32.mrb[0].mxu0
    %v205 = vadd.f32 %v76, %v204
    %v206 = vpop.f32.mrb[0].mxu0
    %207 = vmatprep.mubr.f32.mxu0 0.0
    %208 = vmatmul.mubr.f32.gmra.mrb[0].mxu0 %v106
    %v209 = vpop.f32.mrb[0].mxu0
    %v210 = vadd.f32 %v81, %v209
    %v211 = vpop.f32.mrb[0].mxu0
    %212 = vdwg.mxu0
    %v213 = vmax.f32 %v175, 0.0
    %v214 = vmax.f32 %v180, 0.0
    %v215 = vmax.f32 %v185, 0.0
    %v216 = vmax.f32 %v190, 0.0
    %v217 = vmax.f32 %v195, 0.0
    %v218 = vmax.f32 %v200, 0.0
    %v219 = vmax.f32 %v205, 0.0
    %v220 = vmax.f32 %v210, 0.0
    %v221 = vld [vmem:[%s3] sm:$0x1]
    %v222 = vld [vmem:[#allocation2] sm:$0x1]
    %224 = vset.pattern.permute.xlu0 0
    %225 = vperm.xlu0 %224, %v222
    %v226 = vpop.permute.xlu0 %225
    %v228 = vlaneseq
    %v229 = vshrl.u32 %v228, 7
    %v230 = vsub.s32 0, %v229
    %v231 = vrot.slane %v226, %v230
    %vm232 = vcmask 523264
    %v234 = vsel %vm232, %v221, 0
    %236 = vmatprep.subr.mxu0 0.0
    %237 = vmatpush1.msra.mxu0 %v213
    %238 = vmatprep.subr.mxu0 0.0
    %239 = vmatpush1.msra.mxu0 %v214
    %240 = vmatprep.subr.mxu0 0.0
    %241 = vmatpush1.msra.mxu0 %v215
    %242 = vmatprep.subr.mxu0 0.0
    %243 = vmatpush1.msra.mxu0 %v216
    %244 = vmatprep.subr.mxu0 0.0
    %245 = vmatpush1.msra.mxu0 %v217
    %246 = vmatprep.subr.mxu0 0.0
    %247 = vmatpush1.msra.mxu0 %v218
    %248 = vmatprep.subr.mxu0 0.0
    %249 = vmatpush1.msra.mxu0 %v219
    %250 = vmatprep.subr.mxu0 0.0
    %251 = vmatpush1.msra.mxu0 %v220
    %252 = vmatprep.subr.mxu0 0.0
    %253 = vmatpush1.msra.mxu0 0.0
    %254 = vmatprep.subr.mxu0 0.0
    %255 = vmatpush1.msra.mxu0 0.0
    %256 = vmatprep.subr.mxu0 0.0
    %257 = vmatpush1.msra.mxu0 0.0
    %258 = vmatprep.subr.mxu0 0.0
    %259 = vmatpush1.msra.mxu0 0.0
    %260 = vmatprep.subr.mxu0 0.0
    %261 = vmatpush1.msra.mxu0 0.0
    %262 = vmatprep.subr.mxu0 0.0
    %263 = vmatpush1.msra.mxu0 0.0
    %264 = vmatprep.subr.mxu0 0.0
    %265 = vmatpush1.msra.mxu0 0.0
    %266 = vmatprep.subr.mxu0 0.0
    %267 = vmatpush1.msra.mxu0 0.0
    %268 = vmatprep.subr.mxu0 0.0
    %269 = vmatpush1.msra.mxu0 0.0
    %270 = vmatprep.subr.mxu0 0.0
    %271 = vmatpush1.msra.mxu0 0.0
    %272 = vmatprep.subr.mxu0 0.0
    %273 = vmatpush1.msra.mxu0 0.0
    %274 = vmatprep.subr.mxu0 0.0
    %275 = vmatpush1.msra.mxu0 0.0
    %276 = vmatprep.subr.mxu0 0.0
    %277 = vmatpush1.msra.mxu0 0.0
    %278 = vmatprep.subr.mxu0 0.0
    %279 = vmatpush1.msra.mxu0 0.0
    %280 = vmatprep.subr.mxu0 0.0
    %281 = vmatpush1.msra.mxu0 0.0
    %282 = vmatprep.subr.mxu0 0.0
    %283 = vmatpush1.msra.mxu0 0.0
    %284 = vmatprep.subr.mxu0 0.0
    %285 = vmatpush1.msra.mxu0 0.0
    %286 = vmatprep.subr.mxu0 0.0
    %287 = vmatpush1.msra.mxu0 0.0
    %288 = vmatprep.subr.mxu0 0.0
    %289 = vmatpush1.msra.mxu0 0.0
    %290 = vmatprep.subr.mxu0 0.0
    %291 = vmatpush1.msra.mxu0 0.0
    %292 = vmatprep.subr.mxu0 0.0
    %293 = vmatpush1.msra.mxu0 0.0
    %294 = vmatprep.subr.mxu0 0.0
    %295 = vmatpush1.msra.mxu0 0.0
    %296 = vmatprep.subr.mxu0 0.0
    %297 = vmatpush1.msra.mxu0 0.0
    %298 = vmatprep.subr.mxu0 0.0
    %299 = vmatpush1.msra.mxu0 0.0
    %300 = vmatprep.mubr.f32.mxu0 0.0
    %301 = vmatmul.mubr.f32.gmra.mrb[0].mxu0 %v234
    %v302 = vpop.f32.mrb[0].mxu0
    %v303 = vadd.f32 %v231, %v302
    %v304 = vpop.f32.mrb[0].mxu0
    %305 = vdwg.mxu0
    %v306 = vsub.f32 0.0, %v303
    %v307 = vmul.f32 %v306, 1.442695
    %v308 = vpow.pop %v307
    %v309 = vadd.f32 %v308, 1.0
    %v310 = vrcp.pop %v309
    %v311 = vmul.f32 1.0, %v310
    %312 = vst [vmem:[#allocation3] sm:$0x1] %v311
    %v313 = vsub.f32 1.0, %v311
    %314 = vst [vmem:[#allocation3 + $0x1] sm:$0x1] %v313
    // Predicated region
    $region22: #{tpu_custom_call.1} parent=1 // pred_check
      _
    $region23: #{tpu_custom_call.1} parent=1 // pred_check_branch
      %316 = sbr.rel (0) target = $region25
    $region24: #{tpu_custom_call.1} parent=1 // pred_region
      %s318 = ssub.s32 32, 32
      %319 = vsyncadd [#allocation4], %s318
      %s321 = sshll.u32 [#allocation3], 4
      %s322 = int_to_ptr.vmem [resolvable:$true] %s321
      %324 = dma.vmem_to_hbm [thread:$0]  %s322, 32, %s5, [#allocation4]
    $region25: #{tpu_custom_call.1} parent=1 // pred_fallthru
      _
    // Predicated region
    $region26: #{tpu_custom_call.1} parent=1 // pred_check
      _
    $region27: #{tpu_custom_call.1} parent=1 // pred_check_branch
      %326 = sbr.rel (0) target = $region29
    $region28: #{tpu_custom_call.1} parent=1 // pred_region
      %327 = dma.done [#allocation4], 32
    $region29: #{tpu_custom_call.1} parent=1 // pred_fallthru
      _
    %328 = vsyncpa [#allocation4], 1

</llo_original>
